<compile_context>
chip_gen: v7x
topology: tpu7x:2x2x1
jax: 0.10.0
libtpu: 0.0.40
codegen_flags: <defaults>
</compile_context>

<pallas_src>
import jax
import jax.numpy as jnp
from jax.experimental import pallas as pl
from jax.experimental.pallas import tpu as pltpu

KERNEL_SIZE = 2
N_COMPONENTS = 1
K3 = KERNEL_SIZE ** 3  # 8 output values per input voxel


def _bpca_upsample_kernel(x_ref, p_ref, m_ref, o_ref):
    # x_ref: (TM, W, H)      native dtype  -- tile of input planes
    # p_ref: (2, H, 4H)      x.dtype       -- interleave+scale matrices (resident)
    # m_ref: (2, 1, 4H)      f32           -- interleaved mean rows (resident)
    # o_ref: (TM, 2, W, 4H)  out dtype     -- final-layout output block
    tm, w, h = x_ref.shape
    h4 = 4 * h
    x2 = x_ref[...].reshape(tm * w, h)      # leading-dim merge only; no dtype cast
    for k0 in range(2):                     # static unroll: both output depth planes
        y = jnp.dot(x2, p_ref[k0], preferred_element_type=jnp.float32)   # (tm*w, 4H)
        y = y + m_ref[k0]                                                # (1, 4H) broadcast
        o_ref[:, k0, :, :] = y.reshape(tm, w, h4).astype(o_ref.dtype)


def _round_up(a, b):
    return -(-a // b) * b


def _vmem_budget_and_limit():
    """(per-step tile budget, vmem_limit_bytes) adapted to the TPU generation."""
    cap = None
    try:
        info = pltpu.get_tpu_info()
        cap = int(getattr(info, "vmem_capacity_bytes", 0)) or None
    except Exception:
        cap = None
    if cap is None:
        cap = 64 * 1024 * 1024               # conservative default: v7x per-TC VMEM
    if cap >= 96 * 1024 * 1024:              # v5e / v6e: 128 MiB physical
        return 56 * 1024 * 1024, 64 * 1024 * 1024
    # v7x: 64 MiB physical; leave headroom for compiler-internal scratch.
    return 36 * 1024 * 1024, 48 * 1024 * 1024


def _pick_block_rows(m_total, w, h, in_itemsize, out_itemsize, budget_bytes):
    """Rows per tile from the PADDED VMEM footprint (double-buffered blocks + f32 temps)."""
    h4 = 4 * h
    lanes_in = _round_up(h, 128)     # input tile minor dim is lane-padded to 128
    lanes_out = _round_up(h4, 128)   # output minor dim (exact when 4H % 128 == 0)
    w_pad = _round_up(w, 8)          # sublane padding of the second-minor dim
    per_row = (
        2 * w_pad * lanes_in * in_itemsize            # input block   (double-buffered)
        + 2 * 2 * w_pad * lanes_out * out_itemsize    # (2,W,4H) out block (double-buffered)
        + w * (h + 2 * h4) * 4                        # in-kernel f32 temporaries (x2, y per k0)
    )
    tm = budget_bytes // max(per_row, 1)
    tm = int(min(tm, 2048, m_total))
    if tm >= 8:
        tm -= tm % 8
    return max(tm, 1)


def upsample_bpca3d_forward(x, output_shape, mean, pca_components,
                            kernel_size=2, stride=2, padding=0, dilation=1,
                            n_components=1, block_rows=None):
    """JAX/Pallas port of UpsampleBPCA3D.forward (module defaults)."""
    assert kernel_size == 2 and stride == 2 and padding == 0 and dilation == 1
    # TODO(synk): n_components > 1 (multi-column PCA reconstruction) not implemented.
    assert n_components == 1

    B, C, S, W, H = x.shape
    assert tuple(output_shape) == (B, C, 2 * S, 2 * W, 2 * H)
    H4 = 4 * H
    # NOTE: lane-dense (unmasked) output stores need 4H % 128 == 0 (H % 32 == 0);
    # other H values remain correct but use masked partial stores.

    out_dtype = jnp.result_type(x.dtype, pca_components.dtype, mean.dtype)

    comp = pca_components[:, 0].astype(jnp.float32).reshape(K3)   # (8,)
    mvec = jnp.asarray(mean).astype(jnp.float32).reshape(K3)      # (8,)

    # P[k0][j, k1*2H + 2j' + k2] = comp[4k0+2k1+k2] * (j == j')   -> (2, H, 4H)
    eye = jnp.eye(H, dtype=jnp.float32)
    P = (comp.reshape(2, 1, 2, 1, 2) * eye[None, :, None, :, None]).reshape(2, H, H4)
    P = P.astype(x.dtype)                                          # MXU consumes x's dtype
    # Mrow[k0][0, k1*2H + 2j + k2] = mean[4k0+2k1+k2]              -> (2, 1, 4H), f32
    Mrow = jnp.broadcast_to(mvec.reshape(2, 1, 2, 1, 2), (2, 1, 2, H, 2)).reshape(2, 1, H4)

    M = B * C * S
    x3 = x.reshape(M, W, H)                      # free view, native dtype (no copy)
    budget, vmem_limit = _vmem_budget_and_limit()
    TM = block_rows or _pick_block_rows(M, W, H, x.dtype.itemsize,
                                        jnp.dtype(out_dtype).itemsize, budget)
    grid = (pl.cdiv(M, TM),)

    bytes_accessed = int(M * W * H * x.dtype.itemsize                      # read x once
                         + M * 8 * W * H * jnp.dtype(out_dtype).itemsize   # write out once
                         + int(P.size) * P.dtype.itemsize + int(Mrow.size) * 4)
    flops = int(2 * 2 * M * W * H * H4)          # two (M*W, H) x (H, 4H) matmuls

    out = pl.pallas_call(
        _bpca_upsample_kernel,
        out_shape=jax.ShapeDtypeStruct((M, 2, W, H4), out_dtype),
        grid_spec=pl.GridSpec(
            grid=grid,
            in_specs=[
                pl.BlockSpec((TM, W, H), lambda i: (i, 0, 0)),
                pl.BlockSpec((2, H, H4), lambda i: (0, 0, 0)),   # resident, DMA'd once
                pl.BlockSpec((2, 1, H4), lambda i: (0, 0, 0)),   # resident, DMA'd once
            ],
            out_specs=pl.BlockSpec((TM, 2, W, H4), lambda i: (i, 0, 0, 0)),
        ),
        compiler_params=pltpu.CompilerParams(
            dimension_semantics=("parallel",),
            vmem_limit_bytes=vmem_limit,
        ),
        cost_estimate=pl.CostEstimate(flops=flops, transcendentals=0,
                                      bytes_accessed=bytes_accessed),
    )(x3, P, Mrow)

    # (M, 2, W, 4H) is bit-for-bit the final (B, C, 2S, 2W, 2H) layout: free view.
    return out.reshape(B, C, 2 * S, 2 * W, 2 * H)


if __name__ == "__main__":
    key = jax.random.PRNGKey(0)
    B, C, S, W, H = 2, 4, 4, 16, 32
    kx, km, kc = jax.random.split(key, 3)

    # bf16-exact values keep the MXU product path bit-identical to the f32
    # elementwise reference regardless of matmul pass decomposition.
    x = jax.random.normal(kx, (B, C, S, W, H), jnp.float32)
    x = x.astype(jnp.bfloat16).astype(jnp.float32)
    mean = jax.random.normal(km, (K3,), jnp.float32).astype(jnp.bfloat16).astype(jnp.float32)
    pca_components = jax.random.normal(kc, (K3, N_COMPONENTS), jnp.float32)
    pca_components = pca_components.astype(jnp.bfloat16).astype(jnp.float32)
    output_shape = (B, C, 2 * S, 2 * W, 2 * H)

    out = upsample_bpca3d_forward(x, output_shape, mean, pca_components)
    out = jax.block_until_ready(out)

    # Pure-JAX reference mirroring the torch semantics.
    ref = x[..., None] * pca_components[:, 0].reshape(1, 1, 1, 1, 1, K3) + mean
    ref = ref.reshape(B, C, S, W, H, 2, 2, 2)
    ref = jnp.transpose(ref, (0, 1, 2, 5, 3, 6, 4, 7)).reshape(B, C, 2 * S, 2 * W, 2 * H)

    assert out.shape == tuple(output_shape)
    assert out.dtype == ref.dtype
    assert bool(jnp.allclose(out, ref, atol=1e-5, rtol=1e-5))
    print("KERNEL_OK")
</pallas_src>

<mosaic_0001>
module attributes {stable_mosaic.version = 11 : i64} {
  func.func @_bpca_upsample_kernel(%arg0: i32, %arg1: memref<32x16x32xf32, #tpu.memory_space<vmem>>, %arg2: memref<2x32x128xf32, #tpu.memory_space<vmem>>, %arg3: memref<2x1x128xf32, #tpu.memory_space<vmem>>, %arg4: memref<32x2x16x128xf32, #tpu.memory_space<vmem>>) attributes {dimension_semantics = [#tpu.dimension_semantics<parallel>], iteration_bounds = array<i64: 1>, scalar_prefetch = 0 : i64, scratch_operands = 0 : i64, tpu.core_type = #tpu.core_type<tc>, window_params = [{transform_indices = @transform_0, window_bounds = array<i64: 32, 16, 32>}, {pipeline_mode = #tpu.pipeline_mode<synchronous>, transform_indices = @transform_1, window_bounds = array<i64: 2, 32, 128>}, {pipeline_mode = #tpu.pipeline_mode<synchronous>, transform_indices = @transform_2, window_bounds = array<i64: 2, 1, 128>}, {transform_indices = @transform_3, window_bounds = array<i64: 32, 2, 16, 128>}]} {
    %c0 = arith.constant 0 : index
    %c0_0 = arith.constant 0 : index
    %c0_1 = arith.constant 0 : index
    %0 = vector.load %arg1[%c0, %c0_0, %c0_1] : memref<32x16x32xf32, #tpu.memory_space<vmem>>, vector<32x16x32xf32>
    %1 = vector.shape_cast %0 : vector<32x16x32xf32> to vector<512x32xf32>
    %c0_2 = arith.constant 0 : index
    %c0_3 = arith.constant 0 : index
    %c0_4 = arith.constant 0 : index
    %2 = vector.load %arg2[%c0_2, %c0_3, %c0_4] : memref<2x32x128xf32, #tpu.memory_space<vmem>>, vector<1x32x128xf32>
    %3 = vector.shape_cast %2 : vector<1x32x128xf32> to vector<32x128xf32>
    %cst = arith.constant dense<0.000000e+00> : vector<512x128xf32>
    %4 = tpu.matmul %1, %3, %cst {dimension_numbers = #tpu.dot_dimension_numbers<[1], [0], [0], [1], [0, 0, 1, 1], [], []>} : vector<512x32xf32>, vector<32x128xf32>, vector<512x128xf32> -> vector<512x128xf32>
    %c0_5 = arith.constant 0 : index
    %c0_6 = arith.constant 0 : index
    %c0_7 = arith.constant 0 : index
    %5 = vector.load %arg3[%c0_5, %c0_6, %c0_7] : memref<2x1x128xf32, #tpu.memory_space<vmem>>, vector<1x1x128xf32>
    %6 = vector.shape_cast %5 : vector<1x1x128xf32> to vector<1x128xf32>
    %7 = vector.broadcast %6 : vector<1x128xf32> to vector<512x128xf32>
    %8 = arith.addf %4, %7 : vector<512x128xf32>
    %9 = vector.shape_cast %8 : vector<512x128xf32> to vector<32x16x128xf32>
    %c0_8 = arith.constant 0 : index
    %c0_9 = arith.constant 0 : index
    %c0_10 = arith.constant 0 : index
    %c0_11 = arith.constant 0 : index
    %10 = vector.load %arg4[%c0_8, %c0_9, %c0_10, %c0_11] : memref<32x2x16x128xf32, #tpu.memory_space<vmem>>, vector<32x1x16x128xf32>
    %11 = vector.shape_cast %10 : vector<32x1x16x128xf32> to vector<32x16x128xf32>
    %12 = vector.shape_cast %9 : vector<32x16x128xf32> to vector<32x1x16x128xf32>
    tpu.vector_store %arg4[%c0_8, %c0_9, %c0_10, %c0_11], %12 {strides = array<i32>} : memref<32x2x16x128xf32, #tpu.memory_space<vmem>>, vector<32x1x16x128xf32>,
    %c1 = arith.constant 1 : index
    %c0_12 = arith.constant 0 : index
    %c0_13 = arith.constant 0 : index
    %13 = vector.load %arg2[%c1, %c0_12, %c0_13] : memref<2x32x128xf32, #tpu.memory_space<vmem>>, vector<1x32x128xf32>
    %14 = vector.shape_cast %13 : vector<1x32x128xf32> to vector<32x128xf32>
    %cst_14 = arith.constant dense<0.000000e+00> : vector<512x128xf32>
    %15 = tpu.matmul %1, %14, %cst_14 {dimension_numbers = #tpu.dot_dimension_numbers<[1], [0], [0], [1], [0, 0, 1, 1], [], []>} : vector<512x32xf32>, vector<32x128xf32>, vector<512x128xf32> -> vector<512x128xf32>
    %c1_15 = arith.constant 1 : index
    %c0_16 = arith.constant 0 : index
    %c0_17 = arith.constant 0 : index
    %16 = vector.load %arg3[%c1_15, %c0_16, %c0_17] : memref<2x1x128xf32, #tpu.memory_space<vmem>>, vector<1x1x128xf32>
    %17 = vector.shape_cast %16 : vector<1x1x128xf32> to vector<1x128xf32>
    %18 = vector.broadcast %17 : vector<1x128xf32> to vector<512x128xf32>
    %19 = arith.addf %15, %18 : vector<512x128xf32>
    %20 = vector.shape_cast %19 : vector<512x128xf32> to vector<32x16x128xf32>
    %c0_18 = arith.constant 0 : index
    %c1_19 = arith.constant 1 : index
    %c0_20 = arith.constant 0 : index
    %c0_21 = arith.constant 0 : index
    %21 = vector.load %arg4[%c0_18, %c1_19, %c0_20, %c0_21] : memref<32x2x16x128xf32, #tpu.memory_space<vmem>>, vector<32x1x16x128xf32>
    %22 = vector.shape_cast %21 : vector<32x1x16x128xf32> to vector<32x16x128xf32>
    %23 = vector.shape_cast %20 : vector<32x16x128xf32> to vector<32x1x16x128xf32>
    tpu.vector_store %arg4[%c0_18, %c1_19, %c0_20, %c0_21], %23 {strides = array<i32>} : memref<32x2x16x128xf32, #tpu.memory_space<vmem>>, vector<32x1x16x128xf32>,
    return
  }
  func.func @transform_0(%arg0: i32) -> (i32, i32, i32) {
    %c0_i32 = arith.constant 0 : i32
    %c0_i32_0 = arith.constant 0 : i32
    %c0_i32_1 = arith.constant 0 : i32
    return %arg0, %c0_i32, %c0_i32_0 : i32, i32, i32
  }
  func.func @transform_1(%arg0: i32) -> (i32, i32, i32) {
    %c0_i32 = arith.constant 0 : i32
    %c0_i32_0 = arith.constant 0 : i32
    %c0_i32_1 = arith.constant 0 : i32
    %c0_i32_2 = arith.constant 0 : i32
    return %c0_i32, %c0_i32_0, %c0_i32_1 : i32, i32, i32
  }
  func.func @transform_2(%arg0: i32) -> (i32, i32, i32) {
    %c0_i32 = arith.constant 0 : i32
    %c0_i32_0 = arith.constant 0 : i32
    %c0_i32_1 = arith.constant 0 : i32
    %c0_i32_2 = arith.constant 0 : i32
    return %c0_i32, %c0_i32_0, %c0_i32_1 : i32, i32, i32
  }
  func.func @transform_3(%arg0: i32) -> (i32, i32, i32, i32) {
    %c0_i32 = arith.constant 0 : i32
    %c0_i32_0 = arith.constant 0 : i32
    %c0_i32_1 = arith.constant 0 : i32
    %c0_i32_2 = arith.constant 0 : i32
    return %arg0, %c0_i32, %c0_i32_0, %c0_i32_1 : i32, i32, i32, i32
  }
}

</mosaic_0001>

<llo_original>
// kernel: tpu_custom_call.1
$region0: #{tpu_custom_call.1}
  #allocation0 [shape = 'u32[]', space=smem, size = 0x4, offset = 0x4, fixed_abs, tag = 'smem constant byte address 0x4 - core index']
  #allocation1 [shape = 'u32[144,128]{1,0:T(1,128)}', space=vmem, size = 0x12000, scoped, tag = 'internal scratch']
  %s0 = inlined_call_operand.hbm [shape: f32[32,16,32], index: 0, kind: input, shape index: {}]
  %s1 = inlined_call_operand.hbm [shape: f32[2,32,128], index: 1, kind: input, shape index: {}]
  %s2 = inlined_call_operand.vmem [shape: f32[2,1,128], index: 2, kind: input, shape index: {}]
  %s3 = inlined_call_operand.hbm [shape: f32[32,2,16,128], index: 3, kind: output, shape index: {}]
  %s4 = sld [smem:[#allocation0]]
  $region30: #{tpu_custom_call.1} parent=0
    _
  %s6 = ssub.s32 1, %s4
  %s7 = scalar_select 0, %s6, %s4
  $region1: #{tpu_custom_call.1} parent=0
    #allocation2 [shape = 'u8[262144]{0}', space=vmem, size = 0x40000, scoped, tag = 'input window, operand 0, single buffered']
    #allocation3 [shape = 's32[1]{0}', space=sflag, size = 0x4, scoped, tag = 'scoped memory for tpu_custom_call.1']
    #allocation4 [shape = 's32[1]{0}', space=sflag, size = 0x4, scoped, tag = 'scoped memory for tpu_custom_call.1']
    #allocation5 [shape = 'u8[32768]{0}', space=vmem, size = 0x8000, scoped, tag = 'input window, operand 1, single buffered']
    #allocation6 [shape = 's32[1]{0}', space=sflag, size = 0x4, scoped, tag = 'scoped memory for tpu_custom_call.1']
    #allocation7 [shape = 'u8[524288]{0}', space=vmem, size = 0x80000, scoped, tag = 'output window, operand 0, single buffered']
    %8 = vsyncpa [#allocation3], 0
    %9 = vsyncpa [#allocation6], 0
    %10 = vsyncpa [#allocation4], 0
    // Predicated region
    $region2: #{tpu_custom_call.1} parent=1 // pred_check
      _
    $region3: #{tpu_custom_call.1} parent=1 // pred_check_branch
      %12 = sbr.rel (0) target = $region5
    $region4: #{tpu_custom_call.1} parent=1 // pred_region
      %s14 = ssub.s32 8192, 8192
      %15 = vsyncadd [#allocation3], %s14
      %s16 = sshll.u32 [#allocation2], 4
      %s17 = int_to_ptr.vmem [resolvable:$true] %s16
      %22 = dma.hbm_to_vmem [thread:$0]  %s0, 8192, %s17, [#allocation3], 128, 128, 8
    $region5: #{tpu_custom_call.1} parent=1 // pred_fallthru
      _
    // Predicated region
    $region6: #{tpu_custom_call.1} parent=1 // pred_check
      _
    $region7: #{tpu_custom_call.1} parent=1 // pred_check_branch
      %24 = sbr.rel (0) target = $region9
    $region8: #{tpu_custom_call.1} parent=1 // pred_region
      %s26 = ssub.s32 1024, 1024
      %27 = vsyncadd [#allocation6], %s26
      %s28 = sshll.u32 [#allocation5], 4
      %s29 = int_to_ptr.vmem [resolvable:$true] %s28
      %34 = dma.hbm_to_vmem [thread:$0]  %s1, 1024, %s29, [#allocation6], 128, 128, 8
    $region9: #{tpu_custom_call.1} parent=1 // pred_fallthru
      _
    // Predicated region
    $region10: #{tpu_custom_call.1} parent=1 // pred_check
      _
    $region11: #{tpu_custom_call.1} parent=1 // pred_check_branch
      %36 = sbr.rel (0) target = $region13
    $region12: #{tpu_custom_call.1} parent=1 // pred_region
      _
    $region13: #{tpu_custom_call.1} parent=1 // pred_fallthru
      _
    // Predicated region
    $region14: #{tpu_custom_call.1} parent=1 // pred_check
      _
    $region15: #{tpu_custom_call.1} parent=1 // pred_check_branch
      %38 = sbr.rel (0) target = $region17
    $region16: #{tpu_custom_call.1} parent=1 // pred_region
      %39 = dma.done [#allocation3], 8192
    $region17: #{tpu_custom_call.1} parent=1 // pred_fallthru
      _
    // Predicated region
    $region18: #{tpu_custom_call.1} parent=1 // pred_check
      _
    $region19: #{tpu_custom_call.1} parent=1 // pred_check_branch
      %41 = sbr.rel (0) target = $region21
    $region20: #{tpu_custom_call.1} parent=1 // pred_region
      %42 = dma.done [#allocation6], 1024
    $region21: #{tpu_custom_call.1} parent=1 // pred_fallthru
      _
    %v43 = vld [vmem:[#allocation2] sm:$0xff]
    %v44 = vld [vmem:[#allocation2 + $0x8] sm:$0xff]
    %v45 = vld [vmem:[#allocation2 + $0x10] sm:$0xff]
    %v46 = vld [vmem:[#allocation2 + $0x18] sm:$0xff]
    %v47 = vld [vmem:[#allocation2 + $0x20] sm:$0xff]
    %v48 = vld [vmem:[#allocation2 + $0x28] sm:$0xff]
    %v49 = vld [vmem:[#allocation2 + $0x30] sm:$0xff]
    %v50 = vld [vmem:[#allocation2 + $0x38] sm:$0xff]
    %v51 = vld [vmem:[#allocation2 + $0x40] sm:$0xff]
    %v52 = vld [vmem:[#allocation2 + $0x48] sm:$0xff]
    %v53 = vld [vmem:[#allocation2 + $0x50] sm:$0xff]
    %v54 = vld [vmem:[#allocation2 + $0x58] sm:$0xff]
    %v55 = vld [vmem:[#allocation2 + $0x60] sm:$0xff]
    %v56 = vld [vmem:[#allocation2 + $0x68] sm:$0xff]
    %v57 = vld [vmem:[#allocation2 + $0x70] sm:$0xff]
    %v58 = vld [vmem:[#allocation2 + $0x78] sm:$0xff]
    %v59 = vld [vmem:[#allocation2 + $0x80] sm:$0xff]
    %v60 = vld [vmem:[#allocation2 + $0x88] sm:$0xff]
    %v61 = vld [vmem:[#allocation2 + $0x90] sm:$0xff]
    %v62 = vld [vmem:[#allocation2 + $0x98] sm:$0xff]
    %v63 = vld [vmem:[#allocation2 + $0xa0] sm:$0xff]
    %v64 = vld [vmem:[#allocation2 + $0xa8] sm:$0xff]
    %v65 = vld [vmem:[#allocation2 + $0xb0] sm:$0xff]
    %v66 = vld [vmem:[#allocation2 + $0xb8] sm:$0xff]
    %v67 = vld [vmem:[#allocation2 + $0xc0] sm:$0xff]
    %v68 = vld [vmem:[#allocation2 + $0xc8] sm:$0xff]
    %v69 = vld [vmem:[#allocation2 + $0xd0] sm:$0xff]
    %v70 = vld [vmem:[#allocation2 + $0xd8] sm:$0xff]
    %v71 = vld [vmem:[#allocation2 + $0xe0] sm:$0xff]
    %v72 = vld [vmem:[#allocation2 + $0xe8] sm:$0xff]
    %v73 = vld [vmem:[#allocation2 + $0xf0] sm:$0xff]
    %v74 = vld [vmem:[#allocation2 + $0xf8] sm:$0xff]
    %v75 = vld [vmem:[#allocation2 + $0x100] sm:$0xff]
    %v76 = vld [vmem:[#allocation2 + $0x108] sm:$0xff]
    %v77 = vld [vmem:[#allocation2 + $0x110] sm:$0xff]
    %v78 = vld [vmem:[#allocation2 + $0x118] sm:$0xff]
    %v79 = vld [vmem:[#allocation2 + $0x120] sm:$0xff]
    %v80 = vld [vmem:[#allocation2 + $0x128] sm:$0xff]
    %v81 = vld [vmem:[#allocation2 + $0x130] sm:$0xff]
    %v82 = vld [vmem:[#allocation2 + $0x138] sm:$0xff]
    %v83 = vld [vmem:[#allocation2 + $0x140] sm:$0xff]
    %v84 = vld [vmem:[#allocation2 + $0x148] sm:$0xff]
    %v85 = vld [vmem:[#allocation2 + $0x150] sm:$0xff]
    %v86 = vld [vmem:[#allocation2 + $0x158] sm:$0xff]
    %v87 = vld [vmem:[#allocation2 + $0x160] sm:$0xff]
    %v88 = vld [vmem:[#allocation2 + $0x168] sm:$0xff]
    %v89 = vld [vmem:[#allocation2 + $0x170] sm:$0xff]
    %v90 = vld [vmem:[#allocation2 + $0x178] sm:$0xff]
    %v91 = vld [vmem:[#allocation2 + $0x180] sm:$0xff]
    %v92 = vld [vmem:[#allocation2 + $0x188] sm:$0xff]
    %v93 = vld [vmem:[#allocation2 + $0x190] sm:$0xff]
    %v94 = vld [vmem:[#allocation2 + $0x198] sm:$0xff]
    %v95 = vld [vmem:[#allocation2 + $0x1a0] sm:$0xff]
    %v96 = vld [vmem:[#allocation2 + $0x1a8] sm:$0xff]
    %v97 = vld [vmem:[#allocation2 + $0x1b0] sm:$0xff]
    %v98 = vld [vmem:[#allocation2 + $0x1b8] sm:$0xff]
    %v99 = vld [vmem:[#allocation2 + $0x1c0] sm:$0xff]
    %v100 = vld [vmem:[#allocation2 + $0x1c8] sm:$0xff]
    %v101 = vld [vmem:[#allocation2 + $0x1d0] sm:$0xff]
    %v102 = vld [vmem:[#allocation2 + $0x1d8] sm:$0xff]
    %v103 = vld [vmem:[#allocation2 + $0x1e0] sm:$0xff]
    %v104 = vld [vmem:[#allocation2 + $0x1e8] sm:$0xff]
    %v105 = vld [vmem:[#allocation2 + $0x1f0] sm:$0xff]
    %v106 = vld [vmem:[#allocation2 + $0x1f8] sm:$0xff]
    %v107 = vld [vmem:[#allocation5] sm:$0xff]
    %v108 = vld [vmem:[#allocation5 + $0x8] sm:$0xff]
    %v109 = vld [vmem:[#allocation5 + $0x10] sm:$0xff]
    %v110 = vld [vmem:[#allocation5 + $0x18] sm:$0xff]
    %v111 = vld [vmem:[%s2] sm:$0x1]
    %v113 = vlaneseq
    %v114 = vshrl.u32 %v113, 7
    %v115 = vsub.s32 0, %v114
    %v116 = vrot.slane %v111, %v115
    %vm118 = vcmask 261120
    %v120 = vsel %vm118, %v43, 0
    %v123 = vsel %vm118, %v44, 0
    %v126 = vsel %vm118, %v45, 0
    %v129 = vsel %vm118, %v46, 0
    %v132 = vsel %vm118, %v47, 0
    %v135 = vsel %vm118, %v48, 0
    %v138 = vsel %vm118, %v49, 0
    %v141 = vsel %vm118, %v50, 0
    %v144 = vsel %vm118, %v51, 0
    %v147 = vsel %vm118, %v52, 0
    %v150 = vsel %vm118, %v53, 0
    %v153 = vsel %vm118, %v54, 0
    %v156 = vsel %vm118, %v55, 0
    %v159 = vsel %vm118, %v56, 0
    %v162 = vsel %vm118, %v57, 0
    %v165 = vsel %vm118, %v58, 0
    %v168 = vsel %vm118, %v59, 0
    %v171 = vsel %vm118, %v60, 0
    %v174 = vsel %vm118, %v61, 0
    %v177 = vsel %vm118, %v62, 0
    %v180 = vsel %vm118, %v63, 0
    %v183 = vsel %vm118, %v64, 0
    %v186 = vsel %vm118, %v65, 0
    %v189 = vsel %vm118, %v66, 0
    %v192 = vsel %vm118, %v67, 0
    %v195 = vsel %vm118, %v68, 0
    %v198 = vsel %vm118, %v69, 0
    %v201 = vsel %vm118, %v70, 0
    %v204 = vsel %vm118, %v71, 0
    %v207 = vsel %vm118, %v72, 0
    %v210 = vsel %vm118, %v73, 0
    %v213 = vsel %vm118, %v74, 0
    %v216 = vsel %vm118, %v75, 0
    %v219 = vsel %vm118, %v76, 0
    %v222 = vsel %vm118, %v77, 0
    %v225 = vsel %vm118, %v78, 0
    %v228 = vsel %vm118, %v79, 0
    %v231 = vsel %vm118, %v80, 0
    %v234 = vsel %vm118, %v81, 0
    %v237 = vsel %vm118, %v82, 0
    %v240 = vsel %vm118, %v83, 0
    %v243 = vsel %vm118, %v84, 0
    %v246 = vsel %vm118, %v85, 0
    %v249 = vsel %vm118, %v86, 0
    %v252 = vsel %vm118, %v87, 0
    %v255 = vsel %vm118, %v88, 0
    %v258 = vsel %vm118, %v89, 0
    %v261 = vsel %vm118, %v90, 0
    %v264 = vsel %vm118, %v91, 0
    %v267 = vsel %vm118, %v92, 0
    %v270 = vsel %vm118, %v93, 0
    %v273 = vsel %vm118, %v94, 0
    %v276 = vsel %vm118, %v95, 0
    %v279 = vsel %vm118, %v96, 0
    %v282 = vsel %vm118, %v97, 0
    %v285 = vsel %vm118, %v98, 0
    %v288 = vsel %vm118, %v99, 0
    %v291 = vsel %vm118, %v100, 0
    %v294 = vsel %vm118, %v101, 0
    %v297 = vsel %vm118, %v102, 0
    %v300 = vsel %vm118, %v103, 0
    %v303 = vsel %vm118, %v104, 0
    %v306 = vsel %vm118, %v105, 0
    %v309 = vsel %vm118, %v106, 0
    %311 = vmatprep.subr.mxu0 0.0
    %312 = vmatpush1.msra.mxu0 %v107
    %313 = vmatprep.subr.mxu0 0.0
    %314 = vmatpush1.msra.mxu0 %v108
    %315 = vmatprep.subr.mxu0 0.0
    %316 = vmatpush1.msra.mxu0 %v109
    %317 = vmatprep.subr.mxu0 0.0
    %318 = vmatpush1.msra.mxu0 %v110
    %319 = vmatprep.subr.mxu0 0.0
    %320 = vmatpush1.msra.mxu0 0.0
    %321 = vmatprep.subr.mxu0 0.0
    %322 = vmatpush1.msra.mxu0 0.0
    %323 = vmatprep.subr.mxu0 0.0
    %324 = vmatpush1.msra.mxu0 0.0
    %325 = vmatprep.subr.mxu0 0.0
    %326 = vmatpush1.msra.mxu0 0.0
    %327 = vmatprep.subr.mxu0 0.0
    %328 = vmatpush1.msra.mxu0 0.0
    %329 = vmatprep.subr.mxu0 0.0
    %330 = vmatpush1.msra.mxu0 0.0
    %331 = vmatprep.subr.mxu0 0.0
    %332 = vmatpush1.msra.mxu0 0.0
    %333 = vmatprep.subr.mxu0 0.0
    %334 = vmatpush1.msra.mxu0 0.0
    %335 = vmatprep.subr.mxu0 0.0
    %336 = vmatpush1.msra.mxu0 0.0
    %337 = vmatprep.subr.mxu0 0.0
    %338 = vmatpush1.msra.mxu0 0.0
    %339 = vmatprep.subr.mxu0 0.0
    %340 = vmatpush1.msra.mxu0 0.0
    %341 = vmatprep.subr.mxu0 0.0
    %342 = vmatpush1.msra.mxu0 0.0
    %343 = vmatprep.subr.mxu0 0.0
    %344 = vmatpush1.msra.mxu0 0.0
    %345 = vmatprep.subr.mxu0 0.0
    %346 = vmatpush1.msra.mxu0 0.0
    %347 = vmatprep.subr.mxu0 0.0
    %348 = vmatpush1.msra.mxu0 0.0
    %349 = vmatprep.subr.mxu0 0.0
    %350 = vmatpush1.msra.mxu0 0.0
    %351 = vmatprep.subr.mxu0 0.0
    %352 = vmatpush1.msra.mxu0 0.0
    %353 = vmatprep.subr.mxu0 0.0
    %354 = vmatpush1.msra.mxu0 0.0
    %355 = vmatprep.subr.mxu0 0.0
    %356 = vmatpush1.msra.mxu0 0.0
    %357 = vmatprep.subr.mxu0 0.0
    %358 = vmatpush1.msra.mxu0 0.0
    %359 = vmatprep.subr.mxu0 0.0
    %360 = vmatpush1.msra.mxu0 0.0
    %361 = vmatprep.subr.mxu0 0.0
    %362 = vmatpush1.msra.mxu0 0.0
    %363 = vmatprep.subr.mxu0 0.0
    %364 = vmatpush1.msra.mxu0 0.0
    %365 = vmatprep.subr.mxu0 0.0
    %366 = vmatpush1.msra.mxu0 0.0
    %367 = vmatprep.subr.mxu0 0.0
    %368 = vmatpush1.msra.mxu0 0.0
    %369 = vmatprep.subr.mxu0 0.0
    %370 = vmatpush1.msra.mxu0 0.0
    %371 = vmatprep.subr.mxu0 0.0
    %372 = vmatpush1.msra.mxu0 0.0
    %373 = vmatprep.subr.mxu0 0.0
    %374 = vmatpush1.msra.mxu0 0.0
    %375 = vmatprep.mubr.f32.mxu0 0.0
    %376 = vmatmul.mubr.f32.gmra.mrb[0].mxu0 %v120
    %v377 = vpop.f32.mrb[0].mxu0
    %v378 = vadd.f32 %v116, %v377
    %v379 = vpop.f32.mrb[0].mxu0
    %380 = vmatprep.mubr.f32.mxu0 0.0
    %381 = vmatmul.mubr.f32.gmra.mrb[0].mxu0 %v123
    %v382 = vpop.f32.mrb[0].mxu0
    %v383 = vadd.f32 %v116, %v382
    %v384 = vpop.f32.mrb[0].mxu0
    %385 = vmatprep.mubr.f32.mxu0 0.0
    %386 = vmatmul.mubr.f32.gmra.mrb[0].mxu0 %v126
    %v387 = vpop.f32.mrb[0].mxu0
    %v388 = vadd.f32 %v116, %v387
    %v389 = vpop.f32.mrb[0].mxu0
    %390 = vmatprep.mubr.f32.mxu0 0.0
    %391 = vmatmul.mubr.f32.gmra.mrb[0].mxu0 %v129
    %v392 = vpop.f32.mrb[0].mxu0
    %v393 = vadd.f32 %v116, %v392
    %v394 = vpop.f32.mrb[0].mxu0
    %395 = vmatprep.mubr.f32.mxu0 0.0
    %396 = vmatmul.mubr.f32.gmra.mrb[0].mxu0 %v132
    %v397 = vpop.f32.mrb[0].mxu0
    %v398 = vadd.f32 %v116, %v397
    %v399 = vpop.f32.mrb[0].mxu0
    %400 = vmatprep.mubr.f32.mxu0 0.0
    %401 = vmatmul.mubr.f32.gmra.mrb[0].mxu0 %v135
    %v402 = vpop.f32.mrb[0].mxu0
    %v403 = vadd.f32 %v116, %v402
    %v404 = vpop.f32.mrb[0].mxu0
    %405 = vmatprep.mubr.f32.mxu0 0.0
    %406 = vmatmul.mubr.f32.gmra.mrb[0].mxu0 %v138
    %v407 = vpop.f32.mrb[0].mxu0
    %v408 = vadd.f32 %v116, %v407
    %v409 = vpop.f32.mrb[0].mxu0
    %410 = vmatprep.mubr.f32.mxu0 0.0
    %411 = vmatmul.mubr.f32.gmra.mrb[0].mxu0 %v141
    %v412 = vpop.f32.mrb[0].mxu0
    %v413 = vadd.f32 %v116, %v412
    %v414 = vpop.f32.mrb[0].mxu0
    %415 = vmatprep.mubr.f32.mxu0 0.0
    %416 = vmatmul.mubr.f32.gmra.mrb[0].mxu0 %v144
    %v417 = vpop.f32.mrb[0].mxu0
    %v418 = vadd.f32 %v116, %v417
    %v419 = vpop.f32.mrb[0].mxu0
    %420 = vmatprep.mubr.f32.mxu0 0.0
    %421 = vmatmul.mubr.f32.gmra.mrb[0].mxu0 %v147
    %v422 = vpop.f32.mrb[0].mxu0
    %v423 = vadd.f32 %v116, %v422
    %v424 = vpop.f32.mrb[0].mxu0
    %425 = vmatprep.mubr.f32.mxu0 0.0
    %426 = vmatmul.mubr.f32.gmra.mrb[0].mxu0 %v150
    %v427 = vpop.f32.mrb[0].mxu0
    %v428 = vadd.f32 %v116, %v427
    %v429 = vpop.f32.mrb[0].mxu0
    %430 = vmatprep.mubr.f32.mxu0 0.0
    %431 = vmatmul.mubr.f32.gmra.mrb[0].mxu0 %v153
    %v432 = vpop.f32.mrb[0].mxu0
    %v433 = vadd.f32 %v116, %v432
    %v434 = vpop.f32.mrb[0].mxu0
    %435 = vmatprep.mubr.f32.mxu0 0.0
    %436 = vmatmul.mubr.f32.gmra.mrb[0].mxu0 %v156
    %v437 = vpop.f32.mrb[0].mxu0
    %v438 = vadd.f32 %v116, %v437
    %v439 = vpop.f32.mrb[0].mxu0
    %440 = vmatprep.mubr.f32.mxu0 0.0
    %441 = vmatmul.mubr.f32.gmra.mrb[0].mxu0 %v159
    %v442 = vpop.f32.mrb[0].mxu0
    %v443 = vadd.f32 %v116, %v442
    %v444 = vpop.f32.mrb[0].mxu0
    %445 = vmatprep.mubr.f32.mxu0 0.0
    %446 = vmatmul.mubr.f32.gmra.mrb[0].mxu0 %v162
    %v447 = vpop.f32.mrb[0].mxu0
    %v448 = vadd.f32 %v116, %v447
    %v449 = vpop.f32.mrb[0].mxu0
    %450 = vmatprep.mubr.f32.mxu0 0.0
    %451 = vmatmul.mubr.f32.gmra.mrb[0].mxu0 %v165
    %v452 = vpop.f32.mrb[0].mxu0
    %v453 = vadd.f32 %v116, %v452
    %v454 = vpop.f32.mrb[0].mxu0
    %455 = vmatprep.mubr.f32.mxu0 0.0
    %456 = vmatmul.mubr.f32.gmra.mrb[0].mxu0 %v168
    %v457 = vpop.f32.mrb[0].mxu0
    %v458 = vadd.f32 %v116, %v457
    %v459 = vpop.f32.mrb[0].mxu0
    %460 = vmatprep.mubr.f32.mxu0 0.0
    %461 = vmatmul.mubr.f32.gmra.mrb[0].mxu0 %v171
    %v462 = vpop.f32.mrb[0].mxu0
    %v463 = vadd.f32 %v116, %v462
    %v464 = vpop.f32.mrb[0].mxu0
    %465 = vmatprep.mubr.f32.mxu0 0.0
    %466 = vmatmul.mubr.f32.gmra.mrb[0].mxu0 %v174
    %v467 = vpop.f32.mrb[0].mxu0
    %v468 = vadd.f32 %v116, %v467
    %v469 = vpop.f32.mrb[0].mxu0
    %470 = vmatprep.mubr.f32.mxu0 0.0
    %471 = vmatmul.mubr.f32.gmra.mrb[0].mxu0 %v177
    %v472 = vpop.f32.mrb[0].mxu0
    %v473 = vadd.f32 %v116, %v472
    %v474 = vpop.f32.mrb[0].mxu0
    %475 = vmatprep.mubr.f32.mxu0 0.0
    %476 = vmatmul.mubr.f32.gmra.mrb[0].mxu0 %v180
    %v477 = vpop.f32.mrb[0].mxu0
    %v478 = vadd.f32 %v116, %v477
    %v479 = vpop.f32.mrb[0].mxu0
    %480 = vmatprep.mubr.f32.mxu0 0.0
    %481 = vmatmul.mubr.f32.gmra.mrb[0].mxu0 %v183
    %v482 = vpop.f32.mrb[0].mxu0
    %v483 = vadd.f32 %v116, %v482
    %v484 = vpop.f32.mrb[0].mxu0
    %485 = vmatprep.mubr.f32.mxu0 0.0
    %486 = vmatmul.mubr.f32.gmra.mrb[0].mxu0 %v186
    %v487 = vpop.f32.mrb[0].mxu0
    %v488 = vadd.f32 %v116, %v487
    %v489 = vpop.f32.mrb[0].mxu0
    %490 = vmatprep.mubr.f32.mxu0 0.0
    %491 = vmatmul.mubr.f32.gmra.mrb[0].mxu0 %v189
    %v492 = vpop.f32.mrb[0].mxu0
    %v493 = vadd.f32 %v116, %v492
    %v494 = vpop.f32.mrb[0].mxu0
    %495 = vmatprep.mubr.f32.mxu0 0.0
    %496 = vmatmul.mubr.f32.gmra.mrb[0].mxu0 %v192
    %v497 = vpop.f32.mrb[0].mxu0
    %v498 = vadd.f32 %v116, %v497
    %v499 = vpop.f32.mrb[0].mxu0
    %500 = vmatprep.mubr.f32.mxu0 0.0
    %501 = vmatmul.mubr.f32.gmra.mrb[0].mxu0 %v195
    %v502 = vpop.f32.mrb[0].mxu0
    %v503 = vadd.f32 %v116, %v502
    %v504 = vpop.f32.mrb[0].mxu0
    %505 = vmatprep.mubr.f32.mxu0 0.0
    %506 = vmatmul.mubr.f32.gmra.mrb[0].mxu0 %v198
    %v507 = vpop.f32.mrb[0].mxu0
    %v508 = vadd.f32 %v116, %v507
    %v509 = vpop.f32.mrb[0].mxu0
    %510 = vmatprep.mubr.f32.mxu0 0.0
    %511 = vmatmul.mubr.f32.gmra.mrb[0].mxu0 %v201
    %v512 = vpop.f32.mrb[0].mxu0
    %v513 = vadd.f32 %v116, %v512
    %v514 = vpop.f32.mrb[0].mxu0
    %515 = vmatprep.mubr.f32.mxu0 0.0
    %516 = vmatmul.mubr.f32.gmra.mrb[0].mxu0 %v204
    %v517 = vpop.f32.mrb[0].mxu0
    %v518 = vadd.f32 %v116, %v517
    %v519 = vpop.f32.mrb[0].mxu0
    %520 = vmatprep.mubr.f32.mxu0 0.0
    %521 = vmatmul.mubr.f32.gmra.mrb[0].mxu0 %v207
    %v522 = vpop.f32.mrb[0].mxu0
    %v523 = vadd.f32 %v116, %v522
    %v524 = vpop.f32.mrb[0].mxu0
    %525 = vmatprep.mubr.f32.mxu0 0.0
    %526 = vmatmul.mubr.f32.gmra.mrb[0].mxu0 %v210
    %v527 = vpop.f32.mrb[0].mxu0
    %v528 = vadd.f32 %v116, %v527
    %v529 = vpop.f32.mrb[0].mxu0
    %530 = vmatprep.mubr.f32.mxu0 0.0
    %531 = vmatmul.mubr.f32.gmra.mrb[0].mxu0 %v213
    %v532 = vpop.f32.mrb[0].mxu0
    %v533 = vadd.f32 %v116, %v532
    %v534 = vpop.f32.mrb[0].mxu0
    %535 = vmatprep.mubr.f32.mxu0 0.0
    %536 = vmatmul.mubr.f32.gmra.mrb[0].mxu0 %v216
    %v537 = vpop.f32.mrb[0].mxu0
    %v538 = vadd.f32 %v116, %v537
    %v539 = vpop.f32.mrb[0].mxu0
    %540 = vmatprep.mubr.f32.mxu0 0.0
    %541 = vmatmul.mubr.f32.gmra.mrb[0].mxu0 %v219
    %v542 = vpop.f32.mrb[0].mxu0
    %v543 = vadd.f32 %v116, %v542
    %v544 = vpop.f32.mrb[0].mxu0
    %545 = vmatprep.mubr.f32.mxu0 0.0
    %546 = vmatmul.mubr.f32.gmra.mrb[0].mxu0 %v222
    %v547 = vpop.f32.mrb[0].mxu0
    %v548 = vadd.f32 %v116, %v547
    %v549 = vpop.f32.mrb[0].mxu0
    %550 = vmatprep.mubr.f32.mxu0 0.0
    %551 = vmatmul.mubr.f32.gmra.mrb[0].mxu0 %v225
    %v552 = vpop.f32.mrb[0].mxu0
    %v553 = vadd.f32 %v116, %v552
    %v554 = vpop.f32.mrb[0].mxu0
    %555 = vmatprep.mubr.f32.mxu0 0.0
    %556 = vmatmul.mubr.f32.gmra.mrb[0].mxu0 %v228
    %v557 = vpop.f32.mrb[0].mxu0
    %v558 = vadd.f32 %v116, %v557
    %v559 = vpop.f32.mrb[0].mxu0
    %560 = vmatprep.mubr.f32.mxu0 0.0
    %561 = vmatmul.mubr.f32.gmra.mrb[0].mxu0 %v231
    %v562 = vpop.f32.mrb[0].mxu0
    %v563 = vadd.f32 %v116, %v562
    %v564 = vpop.f32.mrb[0].mxu0
    %565 = vmatprep.mubr.f32.mxu0 0.0
    %566 = vmatmul.mubr.f32.gmra.mrb[0].mxu0 %v234
    %v567 = vpop.f32.mrb[0].mxu0
    %v568 = vadd.f32 %v116, %v567
    %v569 = vpop.f32.mrb[0].mxu0
    %570 = vmatprep.mubr.f32.mxu0 0.0
    %571 = vmatmul.mubr.f32.gmra.mrb[0].mxu0 %v237
    %v572 = vpop.f32.mrb[0].mxu0
    %v573 = vadd.f32 %v116, %v572
    %v574 = vpop.f32.mrb[0].mxu0
    %575 = vmatprep.mubr.f32.mxu0 0.0
    %576 = vmatmul.mubr.f32.gmra.mrb[0].mxu0 %v240
    %v577 = vpop.f32.mrb[0].mxu0
    %v578 = vadd.f32 %v116, %v577
    %v579 = vpop.f32.mrb[0].mxu0
    %580 = vmatprep.mubr.f32.mxu0 0.0
    %581 = vmatmul.mubr.f32.gmra.mrb[0].mxu0 %v243
    %v582 = vpop.f32.mrb[0].mxu0
    %v583 = vadd.f32 %v116, %v582
    %v584 = vpop.f32.mrb[0].mxu0
    %585 = vmatprep.mubr.f32.mxu0 0.0
    %586 = vmatmul.mubr.f32.gmra.mrb[0].mxu0 %v246
    %v587 = vpop.f32.mrb[0].mxu0
    %v588 = vadd.f32 %v116, %v587
    %v589 = vpop.f32.mrb[0].mxu0
    %590 = vmatprep.mubr.f32.mxu0 0.0
    %591 = vmatmul.mubr.f32.gmra.mrb[0].mxu0 %v249
    %v592 = vpop.f32.mrb[0].mxu0
    %v593 = vadd.f32 %v116, %v592
    %v594 = vpop.f32.mrb[0].mxu0
    %595 = vmatprep.mubr.f32.mxu0 0.0
    %596 = vmatmul.mubr.f32.gmra.mrb[0].mxu0 %v252
    %v597 = vpop.f32.mrb[0].mxu0
    %v598 = vadd.f32 %v116, %v597
    %v599 = vpop.f32.mrb[0].mxu0
    %600 = vmatprep.mubr.f32.mxu0 0.0
    %601 = vmatmul.mubr.f32.gmra.mrb[0].mxu0 %v255
    %v602 = vpop.f32.mrb[0].mxu0
    %v603 = vadd.f32 %v116, %v602
    %v604 = vpop.f32.mrb[0].mxu0
    %605 = vmatprep.mubr.f32.mxu0 0.0
    %606 = vmatmul.mubr.f32.gmra.mrb[0].mxu0 %v258
    %v607 = vpop.f32.mrb[0].mxu0
    %v608 = vadd.f32 %v116, %v607
    %v609 = vpop.f32.mrb[0].mxu0
    %610 = vmatprep.mubr.f32.mxu0 0.0
    %611 = vmatmul.mubr.f32.gmra.mrb[0].mxu0 %v261
    %v612 = vpop.f32.mrb[0].mxu0
    %v613 = vadd.f32 %v116, %v612
    %v614 = vpop.f32.mrb[0].mxu0
    %615 = vmatprep.mubr.f32.mxu0 0.0
    %616 = vmatmul.mubr.f32.gmra.mrb[0].mxu0 %v264
    %v617 = vpop.f32.mrb[0].mxu0
    %v618 = vadd.f32 %v116, %v617
    %v619 = vpop.f32.mrb[0].mxu0
    %620 = vmatprep.mubr.f32.mxu0 0.0
    %621 = vmatmul.mubr.f32.gmra.mrb[0].mxu0 %v267
    %v622 = vpop.f32.mrb[0].mxu0
    %v623 = vadd.f32 %v116, %v622
    %v624 = vpop.f32.mrb[0].mxu0
    %625 = vmatprep.mubr.f32.mxu0 0.0
    %626 = vmatmul.mubr.f32.gmra.mrb[0].mxu0 %v270
    %v627 = vpop.f32.mrb[0].mxu0
    %v628 = vadd.f32 %v116, %v627
    %v629 = vpop.f32.mrb[0].mxu0
    %630 = vmatprep.mubr.f32.mxu0 0.0
    %631 = vmatmul.mubr.f32.gmra.mrb[0].mxu0 %v273
    %v632 = vpop.f32.mrb[0].mxu0
    %v633 = vadd.f32 %v116, %v632
    %v634 = vpop.f32.mrb[0].mxu0
    %635 = vmatprep.mubr.f32.mxu0 0.0
    %636 = vmatmul.mubr.f32.gmra.mrb[0].mxu0 %v276
    %v637 = vpop.f32.mrb[0].mxu0
    %v638 = vadd.f32 %v116, %v637
    %v639 = vpop.f32.mrb[0].mxu0
    %640 = vmatprep.mubr.f32.mxu0 0.0
    %641 = vmatmul.mubr.f32.gmra.mrb[0].mxu0 %v279
    %v642 = vpop.f32.mrb[0].mxu0
    %v643 = vadd.f32 %v116, %v642
    %v644 = vpop.f32.mrb[0].mxu0
    %645 = vmatprep.mubr.f32.mxu0 0.0
    %646 = vmatmul.mubr.f32.gmra.mrb[0].mxu0 %v282
    %v647 = vpop.f32.mrb[0].mxu0
    %v648 = vadd.f32 %v116, %v647
    %v649 = vpop.f32.mrb[0].mxu0
    %650 = vmatprep.mubr.f32.mxu0 0.0
    %651 = vmatmul.mubr.f32.gmra.mrb[0].mxu0 %v285
    %v652 = vpop.f32.mrb[0].mxu0
    %v653 = vadd.f32 %v116, %v652
    %v654 = vpop.f32.mrb[0].mxu0
    %655 = vmatprep.mubr.f32.mxu0 0.0
    %656 = vmatmul.mubr.f32.gmra.mrb[0].mxu0 %v288
    %v657 = vpop.f32.mrb[0].mxu0
    %v658 = vadd.f32 %v116, %v657
    %v659 = vpop.f32.mrb[0].mxu0
    %660 = vmatprep.mubr.f32.mxu0 0.0
    %661 = vmatmul.mubr.f32.gmra.mrb[0].mxu0 %v291
    %v662 = vpop.f32.mrb[0].mxu0
    %v663 = vadd.f32 %v116, %v662
    %v664 = vpop.f32.mrb[0].mxu0
    %665 = vmatprep.mubr.f32.mxu0 0.0
    %666 = vmatmul.mubr.f32.gmra.mrb[0].mxu0 %v294
    %v667 = vpop.f32.mrb[0].mxu0
    %v668 = vadd.f32 %v116, %v667
    %v669 = vpop.f32.mrb[0].mxu0
    %670 = vmatprep.mubr.f32.mxu0 0.0
    %671 = vmatmul.mubr.f32.gmra.mrb[0].mxu0 %v297
    %v672 = vpop.f32.mrb[0].mxu0
    %v673 = vadd.f32 %v116, %v672
    %v674 = vpop.f32.mrb[0].mxu0
    %675 = vmatprep.mubr.f32.mxu0 0.0
    %676 = vmatmul.mubr.f32.gmra.mrb[0].mxu0 %v300
    %v677 = vpop.f32.mrb[0].mxu0
    %v678 = vadd.f32 %v116, %v677
    %v679 = vpop.f32.mrb[0].mxu0
    %680 = vmatprep.mubr.f32.mxu0 0.0
    %681 = vmatmul.mubr.f32.gmra.mrb[0].mxu0 %v303
    %v682 = vpop.f32.mrb[0].mxu0
    %v683 = vadd.f32 %v116, %v682
    %v684 = vpop.f32.mrb[0].mxu0
    %685 = vmatprep.mubr.f32.mxu0 0.0
    %686 = vmatmul.mubr.f32.gmra.mrb[0].mxu0 %v306
    %v687 = vpop.f32.mrb[0].mxu0
    %v688 = vadd.f32 %v116, %v687
    %v689 = vpop.f32.mrb[0].mxu0
    %690 = vmatprep.mubr.f32.mxu0 0.0
    %691 = vmatmul.mubr.f32.gmra.mrb[0].mxu0 %v309
    %v692 = vpop.f32.mrb[0].mxu0
    %v693 = vadd.f32 %v116, %v692
    %v694 = vpop.f32.mrb[0].mxu0
    %695 = vdwg.mxu0
    %696 = vst [vmem:[#allocation7] sm:$0xff] %v378
    %697 = vst [vmem:[#allocation7 + $0x8] sm:$0xff] %v383
    %698 = vst [vmem:[#allocation7 + $0x20] sm:$0xff] %v388
    %699 = vst [vmem:[#allocation7 + $0x28] sm:$0xff] %v393
    %700 = vst [vmem:[#allocation7 + $0x40] sm:$0xff] %v398
    %701 = vst [vmem:[#allocation7 + $0x48] sm:$0xff] %v403
    %702 = vst [vmem:[#allocation7 + $0x60] sm:$0xff] %v408
    %703 = vst [vmem:[#allocation7 + $0x68] sm:$0xff] %v413
    %704 = vst [vmem:[#allocation7 + $0x80] sm:$0xff] %v418
    %705 = vst [vmem:[#allocation7 + $0x88] sm:$0xff] %v423
    %706 = vst [vmem:[#allocation7 + $0xa0] sm:$0xff] %v428
    %707 = vst [vmem:[#allocation7 + $0xa8] sm:$0xff] %v433
    %708 = vst [vmem:[#allocation7 + $0xc0] sm:$0xff] %v438
    %709 = vst [vmem:[#allocation7 + $0xc8] sm:$0xff] %v443
    %710 = vst [vmem:[#allocation7 + $0xe0] sm:$0xff] %v448
    %711 = vst [vmem:[#allocation7 + $0xe8] sm:$0xff] %v453
    %712 = vst [vmem:[#allocation7 + $0x100] sm:$0xff] %v458
    %713 = vst [vmem:[#allocation7 + $0x108] sm:$0xff] %v463
    %714 = vst [vmem:[#allocation7 + $0x120] sm:$0xff] %v468
    %715 = vst [vmem:[#allocation7 + $0x128] sm:$0xff] %v473
    %716 = vst [vmem:[#allocation7 + $0x140] sm:$0xff] %v478
    %717 = vst [vmem:[#allocation7 + $0x148] sm:$0xff] %v483
    %718 = vst [vmem:[#allocation7 + $0x160] sm:$0xff] %v488
    %719 = vst [vmem:[#allocation7 + $0x168] sm:$0xff] %v493
    %720 = vst [vmem:[#allocation7 + $0x180] sm:$0xff] %v498
    %721 = vst [vmem:[#allocation7 + $0x188] sm:$0xff] %v503
    %722 = vst [vmem:[#allocation7 + $0x1a0] sm:$0xff] %v508
    %723 = vst [vmem:[#allocation7 + $0x1a8] sm:$0xff] %v513
    %724 = vst [vmem:[#allocation7 + $0x1c0] sm:$0xff] %v518
    %725 = vst [vmem:[#allocation7 + $0x1c8] sm:$0xff] %v523
    %726 = vst [vmem:[#allocation7 + $0x1e0] sm:$0xff] %v528
    %727 = vst [vmem:[#allocation7 + $0x1e8] sm:$0xff] %v533
    %728 = vst [vmem:[#allocation7 + $0x200] sm:$0xff] %v538
    %729 = vst [vmem:[#allocation7 + $0x208] sm:$0xff] %v543
    %730 = vst [vmem:[#allocation7 + $0x220] sm:$0xff] %v548
    %731 = vst [vmem:[#allocation7 + $0x228] sm:$0xff] %v553
    %732 = vst [vmem:[#allocation7 + $0x240] sm:$0xff] %v558
    %733 = vst [vmem:[#allocation7 + $0x248] sm:$0xff] %v563
    %734 = vst [vmem:[#allocation7 + $0x260] sm:$0xff] %v568
    %735 = vst [vmem:[#allocation7 + $0x268] sm:$0xff] %v573
    %736 = vst [vmem:[#allocation7 + $0x280] sm:$0xff] %v578
    %737 = vst [vmem:[#allocation7 + $0x288] sm:$0xff] %v583
    %738 = vst [vmem:[#allocation7 + $0x2a0] sm:$0xff] %v588
    %739 = vst [vmem:[#allocation7 + $0x2a8] sm:$0xff] %v593
    %740 = vst [vmem:[#allocation7 + $0x2c0] sm:$0xff] %v598
    %741 = vst [vmem:[#allocation7 + $0x2c8] sm:$0xff] %v603
    %742 = vst [vmem:[#allocation7 + $0x2e0] sm:$0xff] %v608
    %743 = vst [vmem:[#allocation7 + $0x2e8] sm:$0xff] %v613
    %744 = vst [vmem:[#allocation7 + $0x300] sm:$0xff] %v618
    %745 = vst [vmem:[#allocation7 + $0x308] sm:$0xff] %v623
    %746 = vst [vmem:[#allocation7 + $0x320] sm:$0xff] %v628
    %747 = vst [vmem:[#allocation7 + $0x328] sm:$0xff] %v633
    %748 = vst [vmem:[#allocation7 + $0x340] sm:$0xff] %v638
    %749 = vst [vmem:[#allocation7 + $0x348] sm:$0xff] %v643
    %750 = vst [vmem:[#allocation7 + $0x360] sm:$0xff] %v648
    %751 = vst [vmem:[#allocation7 + $0x368] sm:$0xff] %v653
    %752 = vst [vmem:[#allocation7 + $0x380] sm:$0xff] %v658
    %753 = vst [vmem:[#allocation7 + $0x388] sm:$0xff] %v663
    %754 = vst [vmem:[#allocation7 + $0x3a0] sm:$0xff] %v668
    %755 = vst [vmem:[#allocation7 + $0x3a8] sm:$0xff] %v673
    %756 = vst [vmem:[#allocation7 + $0x3c0] sm:$0xff] %v678
    %757 = vst [vmem:[#allocation7 + $0x3c8] sm:$0xff] %v683
    %758 = vst [vmem:[#allocation7 + $0x3e0] sm:$0xff] %v688
    %759 = vst [vmem:[#allocation7 + $0x3e8] sm:$0xff] %v693
    %s760 = scalar_lea.vmem [#allocation5], 32
    %v761 = vld [vmem:[%s760] sm:$0xff]
    %v762 = vld [vmem:[%s760 + $0x8] sm:$0xff]
    %v763 = vld [vmem:[%s760 + $0x10] sm:$0xff]
    %v764 = vld [vmem:[%s760 + $0x18] sm:$0xff]
    %s765 = scalar_lea.vmem %s2, 1
    %v766 = vld [vmem:[%s765] sm:$0x1]
    %v768 = vlaneseq
    %v769 = vshrl.u32 %v768, 7
    %v770 = vsub.s32 0, %v769
    %v771 = vrot.slane %v766, %v770
    %773 = vmatprep.subr.mxu0 0.0
    %774 = vmatpush1.msra.mxu0 %v761
    %775 = vmatprep.subr.mxu0 0.0
    %776 = vmatpush1.msra.mxu0 %v762
    %777 = vmatprep.subr.mxu0 0.0
    %778 = vmatpush1.msra.mxu0 %v763
    %779 = vmatprep.subr.mxu0 0.0
    %780 = vmatpush1.msra.mxu0 %v764
    %781 = vmatprep.subr.mxu0 0.0
    %782 = vmatpush1.msra.mxu0 0.0
    %783 = vmatprep.subr.mxu0 0.0
    %784 = vmatpush1.msra.mxu0 0.0
    %785 = vmatprep.subr.mxu0 0.0
    %786 = vmatpush1.msra.mxu0 0.0
    %787 = vmatprep.subr.mxu0 0.0
    %788 = vmatpush1.msra.mxu0 0.0
    %789 = vmatprep.subr.mxu0 0.0
    %790 = vmatpush1.msra.mxu0 0.0
    %791 = vmatprep.subr.mxu0 0.0
    %792 = vmatpush1.msra.mxu0 0.0
    %793 = vmatprep.subr.mxu0 0.0
    %794 = vmatpush1.msra.mxu0 0.0
    %795 = vmatprep.subr.mxu0 0.0
    %796 = vmatpush1.msra.mxu0 0.0
    %797 = vmatprep.subr.mxu0 0.0
    %798 = vmatpush1.msra.mxu0 0.0
    %799 = vmatprep.subr.mxu0 0.0
    %800 = vmatpush1.msra.mxu0 0.0
    %801 = vmatprep.subr.mxu0 0.0
    %802 = vmatpush1.msra.mxu0 0.0
    %803 = vmatprep.subr.mxu0 0.0
    %804 = vmatpush1.msra.mxu0 0.0
    %805 = vmatprep.subr.mxu0 0.0
    %806 = vmatpush1.msra.mxu0 0.0
    %807 = vmatprep.subr.mxu0 0.0
    %808 = vmatpush1.msra.mxu0 0.0
    %809 = vmatprep.subr.mxu0 0.0
    %810 = vmatpush1.msra.mxu0 0.0
    %811 = vmatprep.subr.mxu0 0.0
    %812 = vmatpush1.msra.mxu0 0.0
    %813 = vmatprep.subr.mxu0 0.0
    %814 = vmatpush1.msra.mxu0 0.0
    %815 = vmatprep.subr.mxu0 0.0
    %816 = vmatpush1.msra.mxu0 0.0
    %817 = vmatprep.subr.mxu0 0.0
    %818 = vmatpush1.msra.mxu0 0.0
    %819 = vmatprep.subr.mxu0 0.0
    %820 = vmatpush1.msra.mxu0 0.0
    %821 = vmatprep.subr.mxu0 0.0
    %822 = vmatpush1.msra.mxu0 0.0
    %823 = vmatprep.subr.mxu0 0.0
    %824 = vmatpush1.msra.mxu0 0.0
    %825 = vmatprep.subr.mxu0 0.0
    %826 = vmatpush1.msra.mxu0 0.0
    %827 = vmatprep.subr.mxu0 0.0
    %828 = vmatpush1.msra.mxu0 0.0
    %829 = vmatprep.subr.mxu0 0.0
    %830 = vmatpush1.msra.mxu0 0.0
    %831 = vmatprep.subr.mxu0 0.0
    %832 = vmatpush1.msra.mxu0 0.0
    %833 = vmatprep.subr.mxu0 0.0
    %834 = vmatpush1.msra.mxu0 0.0
    %835 = vmatprep.subr.mxu0 0.0
    %836 = vmatpush1.msra.mxu0 0.0
    %837 = vmatprep.mubr.f32.mxu0 0.0
    %838 = vmatmul.mubr.f32.gmra.mrb[0].mxu0 %v120
    %v839 = vpop.f32.mrb[0].mxu0
    %v840 = vadd.f32 %v771, %v839
    %v841 = vpop.f32.mrb[0].mxu0
    %842 = vmatprep.mubr.f32.mxu0 0.0
    %843 = vmatmul.mubr.f32.gmra.mrb[0].mxu0 %v123
    %v844 = vpop.f32.mrb[0].mxu0
    %v845 = vadd.f32 %v771, %v844
    %v846 = vpop.f32.mrb[0].mxu0
    %847 = vmatprep.mubr.f32.mxu0 0.0
    %848 = vmatmul.mubr.f32.gmra.mrb[0].mxu0 %v126
    %v849 = vpop.f32.mrb[0].mxu0
    %v850 = vadd.f32 %v771, %v849
    %v851 = vpop.f32.mrb[0].mxu0
    %852 = vmatprep.mubr.f32.mxu0 0.0
    %853 = vmatmul.mubr.f32.gmra.mrb[0].mxu0 %v129
    %v854 = vpop.f32.mrb[0].mxu0
    %v855 = vadd.f32 %v771, %v854
    %v856 = vpop.f32.mrb[0].mxu0
    %857 = vmatprep.mubr.f32.mxu0 0.0
    %858 = vmatmul.mubr.f32.gmra.mrb[0].mxu0 %v132
    %v859 = vpop.f32.mrb[0].mxu0
    %v860 = vadd.f32 %v771, %v859
    %v861 = vpop.f32.mrb[0].mxu0
    %862 = vmatprep.mubr.f32.mxu0 0.0
    %863 = vmatmul.mubr.f32.gmra.mrb[0].mxu0 %v135
    %v864 = vpop.f32.mrb[0].mxu0
    %v865 = vadd.f32 %v771, %v864
    %v866 = vpop.f32.mrb[0].mxu0
    %867 = vmatprep.mubr.f32.mxu0 0.0
    %868 = vmatmul.mubr.f32.gmra.mrb[0].mxu0 %v138
    %v869 = vpop.f32.mrb[0].mxu0
    %v870 = vadd.f32 %v771, %v869
    %v871 = vpop.f32.mrb[0].mxu0
    %872 = vmatprep.mubr.f32.mxu0 0.0
    %873 = vmatmul.mubr.f32.gmra.mrb[0].mxu0 %v141
    %v874 = vpop.f32.mrb[0].mxu0
    %v875 = vadd.f32 %v771, %v874
    %v876 = vpop.f32.mrb[0].mxu0
    %877 = vmatprep.mubr.f32.mxu0 0.0
    %878 = vmatmul.mubr.f32.gmra.mrb[0].mxu0 %v144
    %v879 = vpop.f32.mrb[0].mxu0
    %v880 = vadd.f32 %v771, %v879
    %v881 = vpop.f32.mrb[0].mxu0
    %882 = vmatprep.mubr.f32.mxu0 0.0
    %883 = vmatmul.mubr.f32.gmra.mrb[0].mxu0 %v147
    %v884 = vpop.f32.mrb[0].mxu0
    %v885 = vadd.f32 %v771, %v884
    %v886 = vpop.f32.mrb[0].mxu0
    %887 = vmatprep.mubr.f32.mxu0 0.0
    %888 = vmatmul.mubr.f32.gmra.mrb[0].mxu0 %v150
    %v889 = vpop.f32.mrb[0].mxu0
    %v890 = vadd.f32 %v771, %v889
    %v891 = vpop.f32.mrb[0].mxu0
    %892 = vmatprep.mubr.f32.mxu0 0.0
    %893 = vmatmul.mubr.f32.gmra.mrb[0].mxu0 %v153
    %v894 = vpop.f32.mrb[0].mxu0
    %v895 = vadd.f32 %v771, %v894
    %v896 = vpop.f32.mrb[0].mxu0
    %897 = vmatprep.mubr.f32.mxu0 0.0
    %898 = vmatmul.mubr.f32.gmra.mrb[0].mxu0 %v156
    %v899 = vpop.f32.mrb[0].mxu0
    %v900 = vadd.f32 %v771, %v899
    %v901 = vpop.f32.mrb[0].mxu0
    %902 = vmatprep.mubr.f32.mxu0 0.0
    %903 = vmatmul.mubr.f32.gmra.mrb[0].mxu0 %v159
    %v904 = vpop.f32.mrb[0].mxu0
    %v905 = vadd.f32 %v771, %v904
    %v906 = vpop.f32.mrb[0].mxu0
    %907 = vmatprep.mubr.f32.mxu0 0.0
    %908 = vmatmul.mubr.f32.gmra.mrb[0].mxu0 %v162
    %v909 = vpop.f32.mrb[0].mxu0
    %v910 = vadd.f32 %v771, %v909
    %v911 = vpop.f32.mrb[0].mxu0
    %912 = vmatprep.mubr.f32.mxu0 0.0
    %913 = vmatmul.mubr.f32.gmra.mrb[0].mxu0 %v165
    %v914 = vpop.f32.mrb[0].mxu0
    %v915 = vadd.f32 %v771, %v914
    %v916 = vpop.f32.mrb[0].mxu0
    %917 = vmatprep.mubr.f32.mxu0 0.0
    %918 = vmatmul.mubr.f32.gmra.mrb[0].mxu0 %v168
    %v919 = vpop.f32.mrb[0].mxu0
    %v920 = vadd.f32 %v771, %v919
    %v921 = vpop.f32.mrb[0].mxu0
    %922 = vmatprep.mubr.f32.mxu0 0.0
    %923 = vmatmul.mubr.f32.gmra.mrb[0].mxu0 %v171
    %v924 = vpop.f32.mrb[0].mxu0
    %v925 = vadd.f32 %v771, %v924
    %v926 = vpop.f32.mrb[0].mxu0
    %927 = vmatprep.mubr.f32.mxu0 0.0
    %928 = vmatmul.mubr.f32.gmra.mrb[0].mxu0 %v174
    %v929 = vpop.f32.mrb[0].mxu0
    %v930 = vadd.f32 %v771, %v929
    %v931 = vpop.f32.mrb[0].mxu0
    %932 = vmatprep.mubr.f32.mxu0 0.0
    %933 = vmatmul.mubr.f32.gmra.mrb[0].mxu0 %v177
    %v934 = vpop.f32.mrb[0].mxu0
    %v935 = vadd.f32 %v771, %v934
    %v936 = vpop.f32.mrb[0].mxu0
    %937 = vmatprep.mubr.f32.mxu0 0.0
    %938 = vmatmul.mubr.f32.gmra.mrb[0].mxu0 %v180
    %v939 = vpop.f32.mrb[0].mxu0
    %v940 = vadd.f32 %v771, %v939
    %v941 = vpop.f32.mrb[0].mxu0
    %942 = vmatprep.mubr.f32.mxu0 0.0
    %943 = vmatmul.mubr.f32.gmra.mrb[0].mxu0 %v183
    %v944 = vpop.f32.mrb[0].mxu0
    %v945 = vadd.f32 %v771, %v944
    %v946 = vpop.f32.mrb[0].mxu0
    %947 = vmatprep.mubr.f32.mxu0 0.0
    %948 = vmatmul.mubr.f32.gmra.mrb[0].mxu0 %v186
    %v949 = vpop.f32.mrb[0].mxu0
    %v950 = vadd.f32 %v771, %v949
    %v951 = vpop.f32.mrb[0].mxu0
    %952 = vmatprep.mubr.f32.mxu0 0.0
    %953 = vmatmul.mubr.f32.gmra.mrb[0].mxu0 %v189
    %v954 = vpop.f32.mrb[0].mxu0
    %v955 = vadd.f32 %v771, %v954
    %v956 = vpop.f32.mrb[0].mxu0
    %957 = vmatprep.mubr.f32.mxu0 0.0
    %958 = vmatmul.mubr.f32.gmra.mrb[0].mxu0 %v192
    %v959 = vpop.f32.mrb[0].mxu0
    %v960 = vadd.f32 %v771, %v959
    %v961 = vpop.f32.mrb[0].mxu0
    %962 = vmatprep.mubr.f32.mxu0 0.0
    %963 = vmatmul.mubr.f32.gmra.mrb[0].mxu0 %v195
    %v964 = vpop.f32.mrb[0].mxu0
    %v965 = vadd.f32 %v771, %v964
    %v966 = vpop.f32.mrb[0].mxu0
    %967 = vmatprep.mubr.f32.mxu0 0.0
    %968 = vmatmul.mubr.f32.gmra.mrb[0].mxu0 %v198
    %v969 = vpop.f32.mrb[0].mxu0
    %v970 = vadd.f32 %v771, %v969
    %v971 = vpop.f32.mrb[0].mxu0
    %972 = vmatprep.mubr.f32.mxu0 0.0
    %973 = vmatmul.mubr.f32.gmra.mrb[0].mxu0 %v201
    %v974 = vpop.f32.mrb[0].mxu0
    %v975 = vadd.f32 %v771, %v974
    %v976 = vpop.f32.mrb[0].mxu0
    %977 = vmatprep.mubr.f32.mxu0 0.0
    %978 = vmatmul.mubr.f32.gmra.mrb[0].mxu0 %v204
    %v979 = vpop.f32.mrb[0].mxu0
    %v980 = vadd.f32 %v771, %v979
    %v981 = vpop.f32.mrb[0].mxu0
    %982 = vmatprep.mubr.f32.mxu0 0.0
    %983 = vmatmul.mubr.f32.gmra.mrb[0].mxu0 %v207
    %v984 = vpop.f32.mrb[0].mxu0
    %v985 = vadd.f32 %v771, %v984
    %v986 = vpop.f32.mrb[0].mxu0
    %987 = vmatprep.mubr.f32.mxu0 0.0
    %988 = vmatmul.mubr.f32.gmra.mrb[0].mxu0 %v210
    %v989 = vpop.f32.mrb[0].mxu0
    %v990 = vadd.f32 %v771, %v989
    %v991 = vpop.f32.mrb[0].mxu0
    %992 = vmatprep.mubr.f32.mxu0 0.0
    %993 = vmatmul.mubr.f32.gmra.mrb[0].mxu0 %v213
    %v994 = vpop.f32.mrb[0].mxu0
    %v995 = vadd.f32 %v771, %v994
    %v996 = vpop.f32.mrb[0].mxu0
    %997 = vmatprep.mubr.f32.mxu0 0.0
    %998 = vmatmul.mubr.f32.gmra.mrb[0].mxu0 %v216
    %v999 = vpop.f32.mrb[0].mxu0
    %v1000 = vadd.f32 %v771, %v999
    %v1001 = vpop.f32.mrb[0].mxu0
    %1002 = vmatprep.mubr.f32.mxu0 0.0
    %1003 = vmatmul.mubr.f32.gmra.mrb[0].mxu0 %v219
    %v1004 = vpop.f32.mrb[0].mxu0
    %v1005 = vadd.f32 %v771, %v1004
    %v1006 = vpop.f32.mrb[0].mxu0
    %1007 = vmatprep.mubr.f32.mxu0 0.0
    %1008 = vmatmul.mubr.f32.gmra.mrb[0].mxu0 %v222
    %v1009 = vpop.f32.mrb[0].mxu0
    %v1010 = vadd.f32 %v771, %v1009
    %v1011 = vpop.f32.mrb[0].mxu0
    %1012 = vmatprep.mubr.f32.mxu0 0.0
    %1013 = vmatmul.mubr.f32.gmra.mrb[0].mxu0 %v225
    %v1014 = vpop.f32.mrb[0].mxu0
    %v1015 = vadd.f32 %v771, %v1014
    %v1016 = vpop.f32.mrb[0].mxu0
    %1017 = vmatprep.mubr.f32.mxu0 0.0
    %1018 = vmatmul.mubr.f32.gmra.mrb[0].mxu0 %v228
    %v1019 = vpop.f32.mrb[0].mxu0
    %v1020 = vadd.f32 %v771, %v1019
    %v1021 = vpop.f32.mrb[0].mxu0
    %1022 = vmatprep.mubr.f32.mxu0 0.0
    %1023 = vmatmul.mubr.f32.gmra.mrb[0].mxu0 %v231
    %v1024 = vpop.f32.mrb[0].mxu0
    %v1025 = vadd.f32 %v771, %v1024
    %v1026 = vpop.f32.mrb[0].mxu0
    %1027 = vmatprep.mubr.f32.mxu0 0.0
    %1028 = vmatmul.mubr.f32.gmra.mrb[0].mxu0 %v234
    %v1029 = vpop.f32.mrb[0].mxu0
    %v1030 = vadd.f32 %v771, %v1029
    %v1031 = vpop.f32.mrb[0].mxu0
    %1032 = vmatprep.mubr.f32.mxu0 0.0
    %1033 = vmatmul.mubr.f32.gmra.mrb[0].mxu0 %v237
    %v1034 = vpop.f32.mrb[0].mxu0
    %v1035 = vadd.f32 %v771, %v1034
    %v1036 = vpop.f32.mrb[0].mxu0
    %1037 = vmatprep.mubr.f32.mxu0 0.0
    %1038 = vmatmul.mubr.f32.gmra.mrb[0].mxu0 %v240
    %v1039 = vpop.f32.mrb[0].mxu0
    %v1040 = vadd.f32 %v771, %v1039
    %v1041 = vpop.f32.mrb[0].mxu0
    %1042 = vmatprep.mubr.f32.mxu0 0.0
    %1043 = vmatmul.mubr.f32.gmra.mrb[0].mxu0 %v243
    %v1044 = vpop.f32.mrb[0].mxu0
    %v1045 = vadd.f32 %v771, %v1044
    %v1046 = vpop.f32.mrb[0].mxu0
    %1047 = vmatprep.mubr.f32.mxu0 0.0
    %1048 = vmatmul.mubr.f32.gmra.mrb[0].mxu0 %v246
    %v1049 = vpop.f32.mrb[0].mxu0
    %v1050 = vadd.f32 %v771, %v1049
    %v1051 = vpop.f32.mrb[0].mxu0
    %1052 = vmatprep.mubr.f32.mxu0 0.0
    %1053 = vmatmul.mubr.f32.gmra.mrb[0].mxu0 %v249
    %v1054 = vpop.f32.mrb[0].mxu0
    %v1055 = vadd.f32 %v771, %v1054
    %v1056 = vpop.f32.mrb[0].mxu0
    %1057 = vmatprep.mubr.f32.mxu0 0.0
    %1058 = vmatmul.mubr.f32.gmra.mrb[0].mxu0 %v252
    %v1059 = vpop.f32.mrb[0].mxu0
    %v1060 = vadd.f32 %v771, %v1059
    %v1061 = vpop.f32.mrb[0].mxu0
    %1062 = vmatprep.mubr.f32.mxu0 0.0
    %1063 = vmatmul.mubr.f32.gmra.mrb[0].mxu0 %v255
    %v1064 = vpop.f32.mrb[0].mxu0
    %v1065 = vadd.f32 %v771, %v1064
    %v1066 = vpop.f32.mrb[0].mxu0
    %1067 = vmatprep.mubr.f32.mxu0 0.0
    %1068 = vmatmul.mubr.f32.gmra.mrb[0].mxu0 %v258
    %v1069 = vpop.f32.mrb[0].mxu0
    %v1070 = vadd.f32 %v771, %v1069
    %v1071 = vpop.f32.mrb[0].mxu0
    %1072 = vmatprep.mubr.f32.mxu0 0.0
    %1073 = vmatmul.mubr.f32.gmra.mrb[0].mxu0 %v261
    %v1074 = vpop.f32.mrb[0].mxu0
    %v1075 = vadd.f32 %v771, %v1074
    %v1076 = vpop.f32.mrb[0].mxu0
    %1077 = vmatprep.mubr.f32.mxu0 0.0
    %1078 = vmatmul.mubr.f32.gmra.mrb[0].mxu0 %v264
    %v1079 = vpop.f32.mrb[0].mxu0
    %v1080 = vadd.f32 %v771, %v1079
    %v1081 = vpop.f32.mrb[0].mxu0
    %1082 = vmatprep.mubr.f32.mxu0 0.0
    %1083 = vmatmul.mubr.f32.gmra.mrb[0].mxu0 %v267
    %v1084 = vpop.f32.mrb[0].mxu0
    %v1085 = vadd.f32 %v771, %v1084
    %v1086 = vpop.f32.mrb[0].mxu0
    %1087 = vmatprep.mubr.f32.mxu0 0.0
    %1088 = vmatmul.mubr.f32.gmra.mrb[0].mxu0 %v270
    %v1089 = vpop.f32.mrb[0].mxu0
    %v1090 = vadd.f32 %v771, %v1089
    %v1091 = vpop.f32.mrb[0].mxu0
    %1092 = vmatprep.mubr.f32.mxu0 0.0
    %1093 = vmatmul.mubr.f32.gmra.mrb[0].mxu0 %v273
    %v1094 = vpop.f32.mrb[0].mxu0
    %v1095 = vadd.f32 %v771, %v1094
    %v1096 = vpop.f32.mrb[0].mxu0
    %1097 = vmatprep.mubr.f32.mxu0 0.0
    %1098 = vmatmul.mubr.f32.gmra.mrb[0].mxu0 %v276
    %v1099 = vpop.f32.mrb[0].mxu0
    %v1100 = vadd.f32 %v771, %v1099
    %v1101 = vpop.f32.mrb[0].mxu0
    %1102 = vmatprep.mubr.f32.mxu0 0.0
    %1103 = vmatmul.mubr.f32.gmra.mrb[0].mxu0 %v279
    %v1104 = vpop.f32.mrb[0].mxu0
    %v1105 = vadd.f32 %v771, %v1104
    %v1106 = vpop.f32.mrb[0].mxu0
    %1107 = vmatprep.mubr.f32.mxu0 0.0
    %1108 = vmatmul.mubr.f32.gmra.mrb[0].mxu0 %v282
    %v1109 = vpop.f32.mrb[0].mxu0
    %v1110 = vadd.f32 %v771, %v1109
    %v1111 = vpop.f32.mrb[0].mxu0
    %1112 = vmatprep.mubr.f32.mxu0 0.0
    %1113 = vmatmul.mubr.f32.gmra.mrb[0].mxu0 %v285
    %v1114 = vpop.f32.mrb[0].mxu0
    %v1115 = vadd.f32 %v771, %v1114
    %v1116 = vpop.f32.mrb[0].mxu0
    %1117 = vmatprep.mubr.f32.mxu0 0.0
    %1118 = vmatmul.mubr.f32.gmra.mrb[0].mxu0 %v288
    %v1119 = vpop.f32.mrb[0].mxu0
    %v1120 = vadd.f32 %v771, %v1119
    %v1121 = vpop.f32.mrb[0].mxu0
    %1122 = vmatprep.mubr.f32.mxu0 0.0
    %1123 = vmatmul.mubr.f32.gmra.mrb[0].mxu0 %v291
    %v1124 = vpop.f32.mrb[0].mxu0
    %v1125 = vadd.f32 %v771, %v1124
    %v1126 = vpop.f32.mrb[0].mxu0
    %1127 = vmatprep.mubr.f32.mxu0 0.0
    %1128 = vmatmul.mubr.f32.gmra.mrb[0].mxu0 %v294
    %v1129 = vpop.f32.mrb[0].mxu0
    %v1130 = vadd.f32 %v771, %v1129
    %v1131 = vpop.f32.mrb[0].mxu0
    %1132 = vmatprep.mubr.f32.mxu0 0.0
    %1133 = vmatmul.mubr.f32.gmra.mrb[0].mxu0 %v297
    %v1134 = vpop.f32.mrb[0].mxu0
    %v1135 = vadd.f32 %v771, %v1134
    %v1136 = vpop.f32.mrb[0].mxu0
    %1137 = vmatprep.mubr.f32.mxu0 0.0
    %1138 = vmatmul.mubr.f32.gmra.mrb[0].mxu0 %v300
    %v1139 = vpop.f32.mrb[0].mxu0
    %v1140 = vadd.f32 %v771, %v1139
    %v1141 = vpop.f32.mrb[0].mxu0
    %1142 = vmatprep.mubr.f32.mxu0 0.0
    %1143 = vmatmul.mubr.f32.gmra.mrb[0].mxu0 %v303
    %v1144 = vpop.f32.mrb[0].mxu0
    %v1145 = vadd.f32 %v771, %v1144
    %v1146 = vpop.f32.mrb[0].mxu0
    %1147 = vmatprep.mubr.f32.mxu0 0.0
    %1148 = vmatmul.mubr.f32.gmra.mrb[0].mxu0 %v306
    %v1149 = vpop.f32.mrb[0].mxu0
    %v1150 = vadd.f32 %v771, %v1149
    %v1151 = vpop.f32.mrb[0].mxu0
    %1152 = vmatprep.mubr.f32.mxu0 0.0
    %1153 = vmatmul.mubr.f32.gmra.mrb[0].mxu0 %v309
    %v1154 = vpop.f32.mrb[0].mxu0
    %v1155 = vadd.f32 %v771, %v1154
    %v1156 = vpop.f32.mrb[0].mxu0
    %1157 = vdwg.mxu0
    %s1158 = scalar_lea.vmem [#allocation7], 16
    %1159 = vst [vmem:[%s1158] sm:$0xff] %v840
    %1160 = vst [vmem:[%s1158 + $0x8] sm:$0xff] %v845
    %1161 = vst [vmem:[%s1158 + $0x20] sm:$0xff] %v850
    %1162 = vst [vmem:[%s1158 + $0x28] sm:$0xff] %v855
    %1163 = vst [vmem:[%s1158 + $0x40] sm:$0xff] %v860
    %1164 = vst [vmem:[%s1158 + $0x48] sm:$0xff] %v865
    %1165 = vst [vmem:[%s1158 + $0x60] sm:$0xff] %v870
    %1166 = vst [vmem:[%s1158 + $0x68] sm:$0xff] %v875
    %1167 = vst [vmem:[%s1158 + $0x80] sm:$0xff] %v880
    %1168 = vst [vmem:[%s1158 + $0x88] sm:$0xff] %v885
    %1169 = vst [vmem:[%s1158 + $0xa0] sm:$0xff] %v890
    %1170 = vst [vmem:[%s1158 + $0xa8] sm:$0xff] %v895
    %1171 = vst [vmem:[%s1158 + $0xc0] sm:$0xff] %v900
    %1172 = vst [vmem:[%s1158 + $0xc8] sm:$0xff] %v905
    %1173 = vst [vmem:[%s1158 + $0xe0] sm:$0xff] %v910
    %1174 = vst [vmem:[%s1158 + $0xe8] sm:$0xff] %v915
    %1175 = vst [vmem:[%s1158 + $0x100] sm:$0xff] %v920
    %1176 = vst [vmem:[%s1158 + $0x108] sm:$0xff] %v925
    %1177 = vst [vmem:[%s1158 + $0x120] sm:$0xff] %v930
    %1178 = vst [vmem:[%s1158 + $0x128] sm:$0xff] %v935
    %1179 = vst [vmem:[%s1158 + $0x140] sm:$0xff] %v940
    %1180 = vst [vmem:[%s1158 + $0x148] sm:$0xff] %v945
    %1181 = vst [vmem:[%s1158 + $0x160] sm:$0xff] %v950
    %1182 = vst [vmem:[%s1158 + $0x168] sm:$0xff] %v955
    %1183 = vst [vmem:[%s1158 + $0x180] sm:$0xff] %v960
    %1184 = vst [vmem:[%s1158 + $0x188] sm:$0xff] %v965
    %1185 = vst [vmem:[%s1158 + $0x1a0] sm:$0xff] %v970
    %1186 = vst [vmem:[%s1158 + $0x1a8] sm:$0xff] %v975
    %1187 = vst [vmem:[%s1158 + $0x1c0] sm:$0xff] %v980
    %1188 = vst [vmem:[%s1158 + $0x1c8] sm:$0xff] %v985
    %1189 = vst [vmem:[%s1158 + $0x1e0] sm:$0xff] %v990
    %1190 = vst [vmem:[%s1158 + $0x1e8] sm:$0xff] %v995
    %1191 = vst [vmem:[%s1158 + $0x200] sm:$0xff] %v1000
    %1192 = vst [vmem:[%s1158 + $0x208] sm:$0xff] %v1005
    %1193 = vst [vmem:[%s1158 + $0x220] sm:$0xff] %v1010
    %1194 = vst [vmem:[%s1158 + $0x228] sm:$0xff] %v1015
    %1195 = vst [vmem:[%s1158 + $0x240] sm:$0xff] %v1020
    %1196 = vst [vmem:[%s1158 + $0x248] sm:$0xff] %v1025
    %1197 = vst [vmem:[%s1158 + $0x260] sm:$0xff] %v1030
    %1198 = vst [vmem:[%s1158 + $0x268] sm:$0xff] %v1035
    %1199 = vst [vmem:[%s1158 + $0x280] sm:$0xff] %v1040
    %1200 = vst [vmem:[%s1158 + $0x288] sm:$0xff] %v1045
    %1201 = vst [vmem:[%s1158 + $0x2a0] sm:$0xff] %v1050
    %1202 = vst [vmem:[%s1158 + $0x2a8] sm:$0xff] %v1055
    %1203 = vst [vmem:[%s1158 + $0x2c0] sm:$0xff] %v1060
    %1204 = vst [vmem:[%s1158 + $0x2c8] sm:$0xff] %v1065
    %1205 = vst [vmem:[%s1158 + $0x2e0] sm:$0xff] %v1070
    %1206 = vst [vmem:[%s1158 + $0x2e8] sm:$0xff] %v1075
    %1207 = vst [vmem:[%s1158 + $0x300] sm:$0xff] %v1080
    %1208 = vst [vmem:[%s1158 + $0x308] sm:$0xff] %v1085
    %1209 = vst [vmem:[%s1158 + $0x320] sm:$0xff] %v1090
    %1210 = vst [vmem:[%s1158 + $0x328] sm:$0xff] %v1095
    %1211 = vst [vmem:[%s1158 + $0x340] sm:$0xff] %v1100
    %1212 = vst [vmem:[%s1158 + $0x348] sm:$0xff] %v1105
    %1213 = vst [vmem:[%s1158 + $0x360] sm:$0xff] %v1110
    %1214 = vst [vmem:[%s1158 + $0x368] sm:$0xff] %v1115
    %1215 = vst [vmem:[%s1158 + $0x380] sm:$0xff] %v1120
    %1216 = vst [vmem:[%s1158 + $0x388] sm:$0xff] %v1125
    %1217 = vst [vmem:[%s1158 + $0x3a0] sm:$0xff] %v1130
    %1218 = vst [vmem:[%s1158 + $0x3a8] sm:$0xff] %v1135
    %1219 = vst [vmem:[%s1158 + $0x3c0] sm:$0xff] %v1140
    %1220 = vst [vmem:[%s1158 + $0x3c8] sm:$0xff] %v1145
    %1221 = vst [vmem:[%s1158 + $0x3e0] sm:$0xff] %v1150
    %1222 = vst [vmem:[%s1158 + $0x3e8] sm:$0xff] %v1155
    // Predicated region
    $region22: #{tpu_custom_call.1} parent=1 // pred_check
      _
    $region23: #{tpu_custom_call.1} parent=1 // pred_check_branch
      %1224 = sbr.rel (0) target = $region25
    $region24: #{tpu_custom_call.1} parent=1 // pred_region
      %s1226 = ssub.s32 16384, 16384
      %1227 = vsyncadd [#allocation4], %s1226
      %s1228 = sshll.u32 [#allocation7], 4
      %s1229 = int_to_ptr.vmem [resolvable:$true] %s1228
      %1234 = dma.vmem_to_hbm [thread:$0]  %s1229, 16384, %s3, [#allocation4], 128, 128, 8
    $region25: #{tpu_custom_call.1} parent=1 // pred_fallthru
      _
    // Predicated region
    $region26: #{tpu_custom_call.1} parent=1 // pred_check
      _
    $region27: #{tpu_custom_call.1} parent=1 // pred_check_branch
      %1236 = sbr.rel (0) target = $region29
    $region28: #{tpu_custom_call.1} parent=1 // pred_region
      %1237 = dma.done [#allocation4], 16384
    $region29: #{tpu_custom_call.1} parent=1 // pred_fallthru
      _
    %1238 = vsyncpa [#allocation3], 1
    %1239 = vsyncpa [#allocation6], 1
    %1240 = vsyncpa [#allocation4], 1

</llo_original>
